<compile_context>
chip_gen: v7x
topology: tpu7x:2x2x1
jax: 0.10.0
libtpu: 0.0.40
codegen_flags: <defaults>
</compile_context>

<pallas_src>
import jax
import jax.numpy as jnp
from jax.experimental import pallas as pl
from jax.experimental.pallas import tpu as pltpu


def _round_up(n: int, m: int) -> int:
    return ((n + m - 1) // m) * m


def diy_linear_kernel(x_ref, w_ref, b_ref, o_ref):
    # (TB, Kp) @ (Kp, Up) on the MXU, accumulate in f32.
    y = jnp.dot(x_ref[...], w_ref[...], preferred_element_type=jnp.float32)
    y = y + b_ref[...]                      # (TB, Up) + (1, Up) broadcast, f32
    o_ref[...] = jnp.maximum(y, 0.0).astype(o_ref.dtype)   # ReLU in f32


def diy_linear_forward(x, w, b, *, block_b=2048, matmul_dtype=None):
    """relu(x @ w + b).

    x: (B, K) float32; w: (K, U) float32; b: (U,) float32.
    matmul_dtype: optionally jnp.bfloat16 to feed bf16 operands to the MXU
                  (v6e/v7x lever); accumulation, bias add and ReLU stay f32.
    """
    B, K = x.shape
    Kw, U = w.shape
    assert K == Kw and b.shape == (U,)

    # --- wrapper-side layout plumbing (all padding is zeros, so results are exact) ---
    K_pad = _round_up(K, 128)               # lane-dense contraction dim
    U_pad = _round_up(U, 128)               # lane-dense output dim (unmasked stores)
    TB = min(block_b, _round_up(B, 8))      # batch tile: >=8 sublanes, <=2048 rows
    B_pad = _round_up(B, TB)

    xp = jnp.pad(x, ((0, B_pad - B), (0, K_pad - K)))
    wp = jnp.pad(w, ((0, K_pad - K), (0, U_pad - U)))
    bp = jnp.pad(b, (0, U_pad - U)).reshape(1, U_pad).astype(jnp.float32)

    if matmul_dtype is not None:
        xp = xp.astype(matmul_dtype)
        wp = wp.astype(matmul_dtype)

    grid = (B_pad // TB,)

    cost = pl.CostEstimate(
        flops=2 * B * K * U,
        transcendentals=0,
        bytes_accessed=(xp.size * xp.dtype.itemsize
                        + wp.size * wp.dtype.itemsize
                        + bp.size * bp.dtype.itemsize
                        + B_pad * U_pad * 4),
    )

    out = pl.pallas_call(
        diy_linear_kernel,
        out_shape=jax.ShapeDtypeStruct((B_pad, U_pad), jnp.float32),
        grid_spec=pltpu.PrefetchScalarGridSpec(
            num_scalar_prefetch=0,
            grid=grid,
            in_specs=[
                pl.BlockSpec((TB, K_pad), lambda i: (i, 0)),      # x: tiled over batch
                pl.BlockSpec((K_pad, U_pad), lambda i: (0, 0)),   # W: VMEM-resident
                pl.BlockSpec((1, U_pad), lambda i: (0, 0)),       # b: VMEM-resident
            ],
            out_specs=pl.BlockSpec((TB, U_pad), lambda i: (i, 0)),
        ),
        compiler_params=pltpu.CompilerParams(
            dimension_semantics=("parallel",),   # shard batch steps across TCs (v7x)
        ),
        cost_estimate=cost,
    )(xp, wp, bp)

    return out[:B, :U]


def diy_linear_reference(x, w, b):
    return jnp.maximum(x @ w + b, 0.0)


if __name__ == "__main__":
    key = jax.random.PRNGKey(0)
    kx, kw, kb = jax.random.split(key, 3)

    IN_UNITS, UNITS = 20, 256

    # X = torch.rand(2, 20); weight = randn(in_units, units); bias = randn(units)
    x = jax.random.uniform(kx, (2, IN_UNITS), dtype=jnp.float32)
    w = jax.random.normal(kw, (IN_UNITS, UNITS), dtype=jnp.float32)
    b = jax.random.normal(kb, (UNITS,), dtype=jnp.float32)

    ref = diy_linear_reference(x, w, b)

    # f32 path (exact vs reference)
    out = jax.block_until_ready(diy_linear_forward(x, w, b))
    assert out.shape == (2, UNITS)
    assert jnp.allclose(out, ref, atol=1e-5, rtol=1e-5), "f32 path mismatch vs reference"

    # bf16-operand path (the v6e/v7x MXU lever); accumulation stays f32.
    out_bf16 = jax.block_until_ready(
        diy_linear_forward(x, w, b, matmul_dtype=jnp.bfloat16))
    assert jnp.allclose(out_bf16, ref, atol=2.5e-1, rtol=5e-2), "bf16 path mismatch vs reference"

    print("KERNEL_OK")
</pallas_src>

<mosaic_0001>
module attributes {stable_mosaic.version = 11 : i64} {
  func.func @diy_linear_kernel(%arg0: i32, %arg1: memref<8x128xf32, #tpu.memory_space<vmem>>, %arg2: memref<128x256xf32, #tpu.memory_space<vmem>>, %arg3: memref<1x256xf32, #tpu.memory_space<vmem>>, %arg4: memref<8x256xf32, #tpu.memory_space<vmem>>) attributes {dimension_semantics = [#tpu.dimension_semantics<parallel>], iteration_bounds = array<i64: 1>, scalar_prefetch = 0 : i64, scratch_operands = 0 : i64, tpu.core_type = #tpu.core_type<tc>, window_params = [{transform_indices = @transform_0, window_bounds = array<i64: 8, 128>}, {pipeline_mode = #tpu.pipeline_mode<synchronous>, transform_indices = @transform_1, window_bounds = array<i64: 128, 256>}, {pipeline_mode = #tpu.pipeline_mode<synchronous>, transform_indices = @transform_2, window_bounds = array<i64: 1, 256>}, {transform_indices = @transform_3, window_bounds = array<i64: 8, 256>}]} {
    %c0 = arith.constant 0 : index
    %c0_0 = arith.constant 0 : index
    %0 = vector.load %arg1[%c0, %c0_0] : memref<8x128xf32, #tpu.memory_space<vmem>>, vector<8x128xf32>
    %c0_1 = arith.constant 0 : index
    %c0_2 = arith.constant 0 : index
    %1 = vector.load %arg2[%c0_1, %c0_2] : memref<128x256xf32, #tpu.memory_space<vmem>>, vector<128x256xf32>
    %cst = arith.constant dense<0.000000e+00> : vector<8x256xf32>
    %2 = tpu.matmul %0, %1, %cst {dimension_numbers = #tpu.dot_dimension_numbers<[1], [0], [0], [1], [0, 0, 1, 1], [], []>} : vector<8x128xf32>, vector<128x256xf32>, vector<8x256xf32> -> vector<8x256xf32>
    %c0_3 = arith.constant 0 : index
    %c0_4 = arith.constant 0 : index
    %3 = vector.load %arg3[%c0_3, %c0_4] : memref<1x256xf32, #tpu.memory_space<vmem>>, vector<1x256xf32>
    %4 = vector.broadcast %3 : vector<1x256xf32> to vector<8x256xf32>
    %5 = arith.addf %2, %4 : vector<8x256xf32>
    %cst_5 = arith.constant 0.000000e+00 : f32
    %6 = vector.broadcast %cst_5 : f32 to vector<8x256xf32>
    %7 = arith.maximumf %5, %6 : vector<8x256xf32>
    %c0_6 = arith.constant 0 : index
    %c0_7 = arith.constant 0 : index
    %8 = vector.load %arg4[%c0_6, %c0_7] : memref<8x256xf32, #tpu.memory_space<vmem>>, vector<8x256xf32>
    tpu.vector_store %arg4[%c0_6, %c0_7], %7 {strides = array<i32>} : memref<8x256xf32, #tpu.memory_space<vmem>>, vector<8x256xf32>,
    return
  }
  func.func @transform_0(%arg0: i32) -> (i32, i32) {
    %c0_i32 = arith.constant 0 : i32
    %c0_i32_0 = arith.constant 0 : i32
    return %arg0, %c0_i32 : i32, i32
  }
  func.func @transform_1(%arg0: i32) -> (i32, i32) {
    %c0_i32 = arith.constant 0 : i32
    %c0_i32_0 = arith.constant 0 : i32
    %c0_i32_1 = arith.constant 0 : i32
    return %c0_i32, %c0_i32_0 : i32, i32
  }
  func.func @transform_2(%arg0: i32) -> (i32, i32) {
    %c0_i32 = arith.constant 0 : i32
    %c0_i32_0 = arith.constant 0 : i32
    %c0_i32_1 = arith.constant 0 : i32
    return %c0_i32, %c0_i32_0 : i32, i32
  }
  func.func @transform_3(%arg0: i32) -> (i32, i32) {
    %c0_i32 = arith.constant 0 : i32
    %c0_i32_0 = arith.constant 0 : i32
    return %arg0, %c0_i32 : i32, i32
  }
}

</mosaic_0001>

<llo_original>
// kernel: tpu_custom_call.1
$region0: #{tpu_custom_call.1}
  #allocation0 [shape = 'u32[]', space=smem, size = 0x4, offset = 0x4, fixed_abs, tag = 'smem constant byte address 0x4 - core index']
  #allocation1 [shape = 'u32[144,128]{1,0:T(1,128)}', space=vmem, size = 0x12000, scoped, tag = 'internal scratch']
  %s0 = inlined_call_operand.hbm [shape: f32[8,128], index: 0, kind: input, shape index: {}]
  %s1 = inlined_call_operand.hbm [shape: f32[128,256], index: 1, kind: input, shape index: {}]
  %s2 = inlined_call_operand.vmem [shape: f32[1,256], index: 2, kind: input, shape index: {}]
  %s3 = inlined_call_operand.hbm [shape: f32[8,256], index: 3, kind: output, shape index: {}]
  %s4 = sld [smem:[#allocation0]]
  $region30: #{tpu_custom_call.1} parent=0
    _
  %s6 = ssub.s32 1, %s4
  %s7 = scalar_select 0, %s6, %s4
  $region1: #{tpu_custom_call.1} parent=0
    #allocation2 [shape = 'u8[4096]{0}', space=vmem, size = 0x1000, scoped, tag = 'input window, operand 0, single buffered']
    #allocation3 [shape = 's32[1]{0}', space=sflag, size = 0x4, scoped, tag = 'scoped memory for tpu_custom_call.1']
    #allocation4 [shape = 's32[1]{0}', space=sflag, size = 0x4, scoped, tag = 'scoped memory for tpu_custom_call.1']
    #allocation5 [shape = 'u8[131072]{0}', space=vmem, size = 0x20000, scoped, tag = 'input window, operand 1, single buffered']
    #allocation6 [shape = 's32[1]{0}', space=sflag, size = 0x4, scoped, tag = 'scoped memory for tpu_custom_call.1']
    #allocation7 [shape = 'u8[8192]{0}', space=vmem, size = 0x2000, scoped, tag = 'output window, operand 0, single buffered']
    %8 = vsyncpa [#allocation3], 0
    %9 = vsyncpa [#allocation6], 0
    %10 = vsyncpa [#allocation4], 0
    // Predicated region
    $region2: #{tpu_custom_call.1} parent=1 // pred_check
      _
    $region3: #{tpu_custom_call.1} parent=1 // pred_check_branch
      %12 = sbr.rel (0) target = $region5
    $region4: #{tpu_custom_call.1} parent=1 // pred_region
      %s14 = ssub.s32 128, 128
      %15 = vsyncadd [#allocation3], %s14
      %s17 = sshll.u32 [#allocation2], 4
      %s18 = int_to_ptr.vmem [resolvable:$true] %s17
      %20 = dma.hbm_to_vmem [thread:$0]  %s0, 128, %s18, [#allocation3]
    $region5: #{tpu_custom_call.1} parent=1 // pred_fallthru
      _
    // Predicated region
    $region6: #{tpu_custom_call.1} parent=1 // pred_check
      _
    $region7: #{tpu_custom_call.1} parent=1 // pred_check_branch
      %22 = sbr.rel (0) target = $region9
    $region8: #{tpu_custom_call.1} parent=1 // pred_region
      %s24 = ssub.s32 4096, 4096
      %25 = vsyncadd [#allocation6], %s24
      %s26 = sshll.u32 [#allocation5], 4
      %s27 = int_to_ptr.vmem [resolvable:$true] %s26
      %32 = dma.hbm_to_vmem [thread:$0]  %s1, 4096, %s27, [#allocation6], 256, 256, 16
    $region9: #{tpu_custom_call.1} parent=1 // pred_fallthru
      _
    // Predicated region
    $region10: #{tpu_custom_call.1} parent=1 // pred_check
      _
    $region11: #{tpu_custom_call.1} parent=1 // pred_check_branch
      %34 = sbr.rel (0) target = $region13
    $region12: #{tpu_custom_call.1} parent=1 // pred_region
      _
    $region13: #{tpu_custom_call.1} parent=1 // pred_fallthru
      _
    // Predicated region
    $region14: #{tpu_custom_call.1} parent=1 // pred_check
      _
    $region15: #{tpu_custom_call.1} parent=1 // pred_check_branch
      %36 = sbr.rel (0) target = $region17
    $region16: #{tpu_custom_call.1} parent=1 // pred_region
      %37 = dma.done [#allocation3], 128
    $region17: #{tpu_custom_call.1} parent=1 // pred_fallthru
      _
    // Predicated region
    $region18: #{tpu_custom_call.1} parent=1 // pred_check
      _
    $region19: #{tpu_custom_call.1} parent=1 // pred_check_branch
      %39 = sbr.rel (0) target = $region21
    $region20: #{tpu_custom_call.1} parent=1 // pred_region
      %40 = dma.done [#allocation6], 4096
    $region21: #{tpu_custom_call.1} parent=1 // pred_fallthru
      _
    %v41 = vld [vmem:[#allocation2] sm:$0xff]
    %v42 = vld [vmem:[#allocation5] sm:$0xff]
    %v43 = vld [vmem:[#allocation5 + $0x8] sm:$0xff]
    %v44 = vld [vmem:[#allocation5 + $0x10] sm:$0xff]
    %v45 = vld [vmem:[#allocation5 + $0x18] sm:$0xff]
    %v46 = vld [vmem:[#allocation5 + $0x20] sm:$0xff]
    %v47 = vld [vmem:[#allocation5 + $0x28] sm:$0xff]
    %v48 = vld [vmem:[#allocation5 + $0x30] sm:$0xff]
    %v49 = vld [vmem:[#allocation5 + $0x38] sm:$0xff]
    %v50 = vld [vmem:[#allocation5 + $0x40] sm:$0xff]
    %v51 = vld [vmem:[#allocation5 + $0x48] sm:$0xff]
    %v52 = vld [vmem:[#allocation5 + $0x50] sm:$0xff]
    %v53 = vld [vmem:[#allocation5 + $0x58] sm:$0xff]
    %v54 = vld [vmem:[#allocation5 + $0x60] sm:$0xff]
    %v55 = vld [vmem:[#allocation5 + $0x68] sm:$0xff]
    %v56 = vld [vmem:[#allocation5 + $0x70] sm:$0xff]
    %v57 = vld [vmem:[#allocation5 + $0x78] sm:$0xff]
    %v58 = vld [vmem:[#allocation5 + $0x80] sm:$0xff]
    %v59 = vld [vmem:[#allocation5 + $0x88] sm:$0xff]
    %v60 = vld [vmem:[#allocation5 + $0x90] sm:$0xff]
    %v61 = vld [vmem:[#allocation5 + $0x98] sm:$0xff]
    %v62 = vld [vmem:[#allocation5 + $0xa0] sm:$0xff]
    %v63 = vld [vmem:[#allocation5 + $0xa8] sm:$0xff]
    %v64 = vld [vmem:[#allocation5 + $0xb0] sm:$0xff]
    %v65 = vld [vmem:[#allocation5 + $0xb8] sm:$0xff]
    %v66 = vld [vmem:[#allocation5 + $0xc0] sm:$0xff]
    %v67 = vld [vmem:[#allocation5 + $0xc8] sm:$0xff]
    %v68 = vld [vmem:[#allocation5 + $0xd0] sm:$0xff]
    %v69 = vld [vmem:[#allocation5 + $0xd8] sm:$0xff]
    %v70 = vld [vmem:[#allocation5 + $0xe0] sm:$0xff]
    %v71 = vld [vmem:[#allocation5 + $0xe8] sm:$0xff]
    %v72 = vld [vmem:[#allocation5 + $0xf0] sm:$0xff]
    %v73 = vld [vmem:[#allocation5 + $0xf8] sm:$0xff]
    %v74 = vld [vmem:[%s2] sm:$0x3]
    %v76 = vlaneseq
    %v77 = vshrl.u32 %v76, 7
    %v78 = vsub.s32 0, %v77
    %v79 = vrot.slane %v74, %v78
    %v80 = vlaneseq
    %v81 = vshrl.u32 %v80, 7
    %v82 = vsub.s32 1, %v81
    %v83 = vrot.slane %v74, %v82
    %86 = vmatprep.subr.mxu0 %v43
    %87 = vmatpush1.msra.mxu0 %v42
    %88 = vmatprep.subr.mxu0 %v45
    %89 = vmatpush1.msra.mxu0 %v44
    %90 = vmatprep.subr.mxu0 %v47
    %91 = vmatpush1.msra.mxu0 %v46
    %92 = vmatprep.subr.mxu0 %v49
    %93 = vmatpush1.msra.mxu0 %v48
    %94 = vmatprep.subr.mxu0 %v51
    %95 = vmatpush1.msra.mxu0 %v50
    %96 = vmatprep.subr.mxu0 %v53
    %97 = vmatpush1.msra.mxu0 %v52
    %98 = vmatprep.subr.mxu0 %v55
    %99 = vmatpush1.msra.mxu0 %v54
    %100 = vmatprep.subr.mxu0 %v57
    %101 = vmatpush1.msra.mxu0 %v56
    %102 = vmatprep.subr.mxu0 %v59
    %103 = vmatpush1.msra.mxu0 %v58
    %104 = vmatprep.subr.mxu0 %v61
    %105 = vmatpush1.msra.mxu0 %v60
    %106 = vmatprep.subr.mxu0 %v63
    %107 = vmatpush1.msra.mxu0 %v62
    %108 = vmatprep.subr.mxu0 %v65
    %109 = vmatpush1.msra.mxu0 %v64
    %110 = vmatprep.subr.mxu0 %v67
    %111 = vmatpush1.msra.mxu0 %v66
    %112 = vmatprep.subr.mxu0 %v69
    %113 = vmatpush1.msra.mxu0 %v68
    %114 = vmatprep.subr.mxu0 %v71
    %115 = vmatpush1.msra.mxu0 %v70
    %116 = vmatprep.subr.mxu0 %v73
    %117 = vmatpush1.msra.mxu0 %v72
    %118 = vmatprep.subr.mxu0 0.0
    %119 = vmatpush1.msra.mxu0 0.0
    %120 = vmatprep.subr.mxu0 0.0
    %121 = vmatpush1.msra.mxu0 0.0
    %122 = vmatprep.subr.mxu0 0.0
    %123 = vmatpush1.msra.mxu0 0.0
    %124 = vmatprep.subr.mxu0 0.0
    %125 = vmatpush1.msra.mxu0 0.0
    %126 = vmatprep.subr.mxu0 0.0
    %127 = vmatpush1.msra.mxu0 0.0
    %128 = vmatprep.subr.mxu0 0.0
    %129 = vmatpush1.msra.mxu0 0.0
    %130 = vmatprep.subr.mxu0 0.0
    %131 = vmatpush1.msra.mxu0 0.0
    %132 = vmatprep.subr.mxu0 0.0
    %133 = vmatpush1.msra.mxu0 0.0
    %134 = vmatprep.subr.mxu0 0.0
    %135 = vmatpush1.msra.mxu0 0.0
    %136 = vmatprep.subr.mxu0 0.0
    %137 = vmatpush1.msra.mxu0 0.0
    %138 = vmatprep.subr.mxu0 0.0
    %139 = vmatpush1.msra.mxu0 0.0
    %140 = vmatprep.subr.mxu0 0.0
    %141 = vmatpush1.msra.mxu0 0.0
    %142 = vmatprep.subr.mxu0 0.0
    %143 = vmatpush1.msra.mxu0 0.0
    %144 = vmatprep.subr.mxu0 0.0
    %145 = vmatpush1.msra.mxu0 0.0
    %146 = vmatprep.subr.mxu0 0.0
    %147 = vmatpush1.msra.mxu0 0.0
    %148 = vmatprep.subr.mxu0 0.0
    %149 = vmatpush1.msra.mxu0 0.0
    %150 = vmatprep.mubr.f32.mxu0 0.0
    %151 = vmatmul.mubr.f32.gmra.mrb[0].mxu0 %v41
    %v152 = vpop.f32.mrb[0].mxu0
    %v153 = vadd.f32 %v79, %v152
    %v154 = vpop.f32.mrb[0].mxu0
    %v155 = vadd.f32 %v83, %v154
    %156 = vdwg.mxu0
    %v157 = vmax.f32 %v153, 0.0
    %v158 = vmax.f32 %v155, 0.0
    %159 = vst [vmem:[#allocation7] sm:$0xff] %v157
    %160 = vst [vmem:[#allocation7 + $0x8] sm:$0xff] %v158
    // Predicated region
    $region22: #{tpu_custom_call.1} parent=1 // pred_check
      _
    $region23: #{tpu_custom_call.1} parent=1 // pred_check_branch
      %162 = sbr.rel (0) target = $region25
    $region24: #{tpu_custom_call.1} parent=1 // pred_region
      %s164 = ssub.s32 256, 256
      %165 = vsyncadd [#allocation4], %s164
      %s167 = sshll.u32 [#allocation7], 4
      %s168 = int_to_ptr.vmem [resolvable:$true] %s167
      %170 = dma.vmem_to_hbm [thread:$0]  %s168, 256, %s3, [#allocation4]
    $region25: #{tpu_custom_call.1} parent=1 // pred_fallthru
      _
    // Predicated region
    $region26: #{tpu_custom_call.1} parent=1 // pred_check
      _
    $region27: #{tpu_custom_call.1} parent=1 // pred_check_branch
      %172 = sbr.rel (0) target = $region29
    $region28: #{tpu_custom_call.1} parent=1 // pred_region
      %173 = dma.done [#allocation4], 256
    $region29: #{tpu_custom_call.1} parent=1 // pred_fallthru
      _
    %174 = vsyncpa [#allocation3], 1
    %175 = vsyncpa [#allocation6], 1
    %176 = vsyncpa [#allocation4], 1

</llo_original>
